<compile_context>
chip_gen: v6e
topology: v6e:2x2x1
jax: 0.10.0
libtpu: 0.0.40
codegen_flags: <defaults>
</compile_context>

<pallas_src>
import math
from functools import partial

import jax
import jax.numpy as jnp
from jax.experimental import pallas as pl
from jax.experimental.pallas import tpu as pltpu

_EPS = 1e-5                      # nn.LayerNorm default
_INV_SQRT2 = 1.0 / math.sqrt(2.0)
_MIB = 1024 * 1024


def _device_budget():
    """Per-TPU-generation (seq_tile_target, vmem_limit_bytes)."""
    try:
        vmem_phys = int(pltpu.get_tpu_info().vmem_capacity_bytes)
    except Exception:
        vmem_phys = None
    if vmem_phys is None:
        return 512, 48 * _MIB                                    # unknown: conservative
    if vmem_phys <= 64 * _MIB:                                   # v7x: 64 MiB per TC
        return 256, min(52 * _MIB, int(0.82 * vmem_phys))
    return 1024, min(100 * _MIB, int(0.80 * vmem_phys))          # v5e / v6e: 128 MiB


def _gelu(h, approx):
    if approx:
        # tanh approximation -> transcendental goes to the EUP slot.
        c = math.sqrt(2.0 / math.pi)
        return 0.5 * h * (1.0 + jnp.tanh(c * (h + 0.044715 * h * h * h)))
    # exact erf GELU (torch FeedForward('gelu') default semantics).
    return 0.5 * h * (1.0 + jax.lax.erf(h * _INV_SQRT2))


def _compute(x_f32, w1_ref, b1_ref, w2_ref, b2_ref, g2_ref, bt2_ref, approx_gelu):
    """LN(affine folded) -> Linear -> GELU -> Linear -> LN on one (TS, Din) tile."""
    b1 = b1_ref[...]        # fp32 (LN1 beta folded in)
    b2 = b2_ref[...]        # fp32
    g2 = g2_ref[...]        # fp32
    bt2 = bt2_ref[...]      # fp32

    # FP32LayerNorm #1 (gamma/beta folded into W1/b1): one-pass variance.
    mu = jnp.mean(x_f32, axis=-1, keepdims=True)
    var = jnp.maximum(jnp.mean(x_f32 * x_f32, axis=-1, keepdims=True) - mu * mu, 0.0)
    z = (x_f32 - mu) * jax.lax.rsqrt(var + _EPS)

    # Linear -> GELU -> Linear; bf16 MXU inputs, fp32 accumulation.
    h = jnp.dot(z.astype(jnp.bfloat16), w1_ref[...],
                preferred_element_type=jnp.float32) + b1
    h = _gelu(h, approx_gelu)
    y = jnp.dot(h.astype(jnp.bfloat16), w2_ref[...],
                preferred_element_type=jnp.float32) + b2

    # FP32LayerNorm #2: one-pass variance.
    mu2 = jnp.mean(y, axis=-1, keepdims=True)
    var2 = jnp.maximum(jnp.mean(y * y, axis=-1, keepdims=True) - mu2 * mu2, 0.0)
    return (y - mu2) * jax.lax.rsqrt(var2 + _EPS) * g2 + bt2


def _wan_kernel_pos(x_ref, pos_ref, w1_ref, b1_ref, w2_ref, b2_ref,
                    g2_ref, bt2_ref, o_ref, *, approx_gelu=False):
    x = x_ref[...].astype(jnp.float32) + pos_ref[...].astype(jnp.float32)
    o_ref[...] = _compute(x, w1_ref, b1_ref, w2_ref, b2_ref,
                          g2_ref, bt2_ref, approx_gelu).astype(o_ref.dtype)


def _wan_kernel_nopos(x_ref, w1_ref, b1_ref, w2_ref, b2_ref,
                      g2_ref, bt2_ref, o_ref, *, approx_gelu=False):
    x = x_ref[...].astype(jnp.float32)
    o_ref[...] = _compute(x, w1_ref, b1_ref, w2_ref, b2_ref,
                          g2_ref, bt2_ref, approx_gelu).astype(o_ref.dtype)


def _param_specs(din, dinner, dout, grid_rank, single_buffer):
    """Constant-index specs for the folded weights / small fp32 params."""
    if grid_rank == 1:
        const = lambda r: (0, 0)
    else:
        const = lambda b, s: (0, 0)
    kw = {"pipeline_mode": pl.Buffered(1)} if single_buffer else {}
    shapes = [(din, dinner), (1, dinner), (dinner, dout),
              (1, dout), (1, dout), (1, dout)]
    return [pl.BlockSpec(shp, const, **kw) for shp in shapes]


def wan_image_embedding(x, params, pos_embed=None, *, seq_tile=None,
                        out_dtype=None, approximate_gelu=False):
    """x: (B, S, Din).  Mirrors WanImageEmbedding.forward."""
    has_pos = pos_embed is not None
    if has_pos:
        bsz, slen, dim = x.shape
        x = x.reshape(-1, 2 * slen, dim)          # torch .view(-1, 2*seq_len, D)
        pos = pos_embed.reshape(pos_embed.shape[-2], pos_embed.shape[-1])

    Bp, Sp, Din = x.shape
    Dinner = params["w1"].shape[1]
    Dout = params["w2"].shape[1]
    out_dtype = x.dtype if out_dtype is None else out_dtype

    ts_target, vmem_limit = _device_budget()
    if seq_tile is not None:
        ts_target = int(seq_tile)

    # ---- fold LN1 gamma/beta into the first linear (fp32 math, bf16 weight) ----
    g1 = params["g1"].astype(jnp.float32).reshape(-1)
    bt1 = params["bt1"].astype(jnp.float32).reshape(-1)
    w1f = params["w1"].astype(jnp.float32)
    w1 = (g1[:, None] * w1f).astype(jnp.bfloat16)                       # (Din, Dinner)
    b1 = (bt1 @ w1f + params["b1"].astype(jnp.float32).reshape(-1)
          ).reshape(1, Dinner)                                          # fp32
    w2 = params["w2"].astype(jnp.bfloat16)                              # (Dinner, Dout)
    b2 = params["b2"].astype(jnp.float32).reshape(1, Dout)
    g2 = params["g2"].astype(jnp.float32).reshape(1, Dout)
    bt2 = params["bt2"].astype(jnp.float32).reshape(1, Dout)
    param_args = (w1, b1, w2, b2, g2, bt2)

    xbytes = jnp.dtype(x.dtype).itemsize
    obytes = jnp.dtype(out_dtype).itemsize

    def pick_ts(extent):
        if extent <= ts_target:
            return extent                              # full-extent block
        # Fit 2x I/O blocks + single-buffered bf16 weights + fp32 temporaries.
        per_row = 2 * Din * xbytes + 2 * Dout * obytes + 4 * (Din + Dinner + 2 * Dout)
        fixed = 2 * (Din * Dinner + Dinner * Dout) + (4 << 20)
        budget = int(0.85 * vmem_limit) - fixed
        ts = ts_target
        if budget > 8 * per_row:
            ts = min(ts, (budget // per_row) // 8 * 8)
        ts = max(8, (ts // 8) * 8)
        return min(ts, extent)

    if has_pos:
        ts = pick_ts(Sp)
        if Sp % ts == 0:
            # Flatten (B, S) -> rows: 1-D grid, longer pipeline, balanced megacore.
            rows = Bp * Sp
            tiles_per_seq = Sp // ts
            xr = x.reshape(rows, Din)
            grid = (rows // ts,)
            in_specs = [pl.BlockSpec((ts, Din), lambda r: (r, 0)),
                        pl.BlockSpec((ts, Din), lambda r: (r % tiles_per_seq, 0))]
            out_specs = pl.BlockSpec((ts, Dout), lambda r: (r, 0))
            out_shape = jax.ShapeDtypeStruct((rows, Dout), out_dtype)
            args = (xr, pos)
            reshape_out = (Bp, Sp, Dout)
        else:
            # Fallback 2-D grid keeps pos-embed row alignment for partial tiles.
            grid = (Bp, pl.cdiv(Sp, ts))
            in_specs = [pl.BlockSpec((None, ts, Din), lambda b, s: (b, s, 0)),
                        pl.BlockSpec((ts, Din), lambda b, s: (s, 0))]
            out_specs = pl.BlockSpec((None, ts, Dout), lambda b, s: (b, s, 0))
            out_shape = jax.ShapeDtypeStruct((Bp, Sp, Dout), out_dtype)
            args = (x, pos)
            reshape_out = None
        kernel = partial(_wan_kernel_pos, approx_gelu=approximate_gelu)
    else:
        rows = Bp * Sp
        ts = pick_ts(rows)
        xr = x.reshape(rows, Din)
        grid = (pl.cdiv(rows, ts),)
        in_specs = [pl.BlockSpec((ts, Din), lambda r: (r, 0))]
        out_specs = pl.BlockSpec((ts, Dout), lambda r: (r, 0))
        out_shape = jax.ShapeDtypeStruct((rows, Dout), out_dtype)
        args = (xr,)
        reshape_out = (Bp, Sp, Dout)
        kernel = partial(_wan_kernel_nopos, approx_gelu=approximate_gelu)

    def _build(single_buffer_params):
        specs = list(in_specs) + _param_specs(Din, Dinner, Dout, len(grid),
                                              single_buffer_params)
        return pl.pallas_call(
            kernel,
            out_shape=out_shape,
            grid_spec=pltpu.PrefetchScalarGridSpec(
                num_scalar_prefetch=0,
                grid=grid,
                in_specs=specs,
                out_specs=out_specs,
            ),
            compiler_params=pltpu.CompilerParams(
                dimension_semantics=("parallel",) * len(grid),
                vmem_limit_bytes=int(vmem_limit),
            ),
        )

    try:
        out = _build(True)(*args, *param_args)
    except Exception:
        # pipeline_mode=pl.Buffered(1) not supported by this jax/libtpu build:
        # fall back to default double-buffered param specs (identical results).
        out = _build(False)(*args, *param_args)

    if reshape_out is not None:
        out = out.reshape(reshape_out)
    return out


def init_params(key, in_features, out_features):
    """Synthetic init matching the torch module shapes.

    Big weights in bf16 (MXU path); LN affine params and biases in fp32
    (negligible DMA, exact FP32LayerNorm numerics).
    """
    inner = in_features  # FeedForward(mult=1) -> inner_dim == in_features
    k1, k2, k3, k4 = jax.random.split(key, 4)
    s1 = 1.0 / math.sqrt(in_features)
    s2 = 1.0 / math.sqrt(inner)
    return dict(
        g1=jnp.ones((1, in_features), jnp.float32),
        bt1=jnp.zeros((1, in_features), jnp.float32),
        w1=jax.random.uniform(k1, (in_features, inner), jnp.float32, -s1, s1
                              ).astype(jnp.bfloat16),
        b1=jax.random.uniform(k2, (1, inner), jnp.float32, -s1, s1),
        w2=jax.random.uniform(k3, (inner, out_features), jnp.float32, -s2, s2
                              ).astype(jnp.bfloat16),
        b2=jax.random.uniform(k4, (1, out_features), jnp.float32, -s2, s2),
        g2=jnp.ones((1, out_features), jnp.float32),
        bt2=jnp.zeros((1, out_features), jnp.float32),
    )


def _reference(x, params, pos_embed=None):
    """Plain-JAX fp32 reference of the torch forward (unfolded params)."""
    if pos_embed is not None:
        b, s, d = x.shape
        x = x.reshape(-1, 2 * s, d) + pos_embed

    def ln(v, g, bt):
        mu = jnp.mean(v, -1, keepdims=True)
        var = jnp.mean(jnp.square(v - mu), -1, keepdims=True)
        return (v - mu) * jax.lax.rsqrt(var + _EPS) * g + bt

    f32 = lambda a: a.astype(jnp.float32)
    h = ln(f32(x), f32(params["g1"][0]), f32(params["bt1"][0]))
    h = jnp.dot(h, f32(params["w1"]), precision=jax.lax.Precision.HIGHEST) \
        + f32(params["b1"][0])
    h = 0.5 * h * (1.0 + jax.lax.erf(h * _INV_SQRT2))
    h = jnp.dot(h, f32(params["w2"]), precision=jax.lax.Precision.HIGHEST) \
        + f32(params["b2"][0])
    return ln(h, f32(params["g2"][0]), f32(params["bt2"][0]))


if __name__ == "__main__":
    in_features, out_features = 32, 64
    batch, seq = 2, 8
    pos_embed_seq_len = 2 * seq                   # exercises the pos-embed branch

    key = jax.random.PRNGKey(0)
    kx, kp, kparam = jax.random.split(key, 3)

    x = jax.random.normal(kx, (batch, seq, in_features), jnp.float32)
    # torch init is zeros; small deterministic values so the add is exercised.
    pos_embed = 0.02 * jax.random.normal(
        kp, (1, pos_embed_seq_len, in_features), jnp.float32)
    params = init_params(kparam, in_features, out_features)

    # ---- pos_embed path ----
    out = jax.block_until_ready(wan_image_embedding(x, params, pos_embed))
    ref = _reference(x, params, pos_embed)
    assert out.shape == (batch // 2, 2 * seq, out_features), out.shape
    err = float(jnp.max(jnp.abs(out - ref)))
    assert err < 2e-2, f"pos path max abs err {err}"      # bf16-matmul tolerance

    # ---- pos_embed=None path ----
    out2 = jax.block_until_ready(wan_image_embedding(x, params, None))
    ref2 = _reference(x, params, None)
    assert out2.shape == (batch, seq, out_features), out2.shape
    err2 = float(jnp.max(jnp.abs(out2 - ref2)))
    assert err2 < 2e-2, f"no-pos path max abs err {err2}"

    # ---- bf16 I/O smoke test (halved HBM traffic; LN math stays fp32) ----
    out3 = jax.block_until_ready(
        wan_image_embedding(x.astype(jnp.bfloat16), params, None))
    assert out3.shape == (batch, seq, out_features) and out3.dtype == jnp.bfloat16
    assert bool(jnp.all(jnp.isfinite(out3.astype(jnp.float32))))

    print("KERNEL_OK")
</pallas_src>

<mosaic_0001>
module attributes {stable_mosaic.version = 11 : i64} {
  func.func @_wan_kernel_pos(%arg0: i32, %arg1: memref<16x32xf32, #tpu.memory_space<vmem>>, %arg2: memref<16x32xf32, #tpu.memory_space<vmem>>, %arg3: memref<32x32xbf16, #tpu.memory_space<vmem>>, %arg4: memref<1x32xf32, #tpu.memory_space<vmem>>, %arg5: memref<32x64xbf16, #tpu.memory_space<vmem>>, %arg6: memref<1x64xf32, #tpu.memory_space<vmem>>, %arg7: memref<1x64xf32, #tpu.memory_space<vmem>>, %arg8: memref<1x64xf32, #tpu.memory_space<vmem>>, %arg9: memref<16x64xf32, #tpu.memory_space<vmem>>) attributes {dimension_semantics = [#tpu.dimension_semantics<parallel>], iteration_bounds = array<i64: 1>, scalar_prefetch = 0 : i64, scratch_operands = 0 : i64, tpu.core_type = #tpu.core_type<tc>, window_params = [{transform_indices = @transform_0, window_bounds = array<i64: 16, 32>}, {transform_indices = @transform_1, window_bounds = array<i64: 16, 32>}, {pipeline_mode = #tpu.pipeline_mode<synchronous>, transform_indices = @transform_2, window_bounds = array<i64: 32, 32>}, {pipeline_mode = #tpu.pipeline_mode<synchronous>, transform_indices = @transform_3, window_bounds = array<i64: 1, 32>}, {pipeline_mode = #tpu.pipeline_mode<synchronous>, transform_indices = @transform_4, window_bounds = array<i64: 32, 64>}, {pipeline_mode = #tpu.pipeline_mode<synchronous>, transform_indices = @transform_5, window_bounds = array<i64: 1, 64>}, {pipeline_mode = #tpu.pipeline_mode<synchronous>, transform_indices = @transform_6, window_bounds = array<i64: 1, 64>}, {pipeline_mode = #tpu.pipeline_mode<synchronous>, transform_indices = @transform_7, window_bounds = array<i64: 1, 64>}, {transform_indices = @transform_8, window_bounds = array<i64: 16, 64>}]} {
    %c0 = arith.constant 0 : index
    %c0_0 = arith.constant 0 : index
    %0 = vector.load %arg1[%c0, %c0_0] : memref<16x32xf32, #tpu.memory_space<vmem>>, vector<16x32xf32>
    %c0_1 = arith.constant 0 : index
    %c0_2 = arith.constant 0 : index
    %1 = vector.load %arg2[%c0_1, %c0_2] : memref<16x32xf32, #tpu.memory_space<vmem>>, vector<16x32xf32>
    %2 = arith.addf %0, %1 : vector<16x32xf32>
    %c0_3 = arith.constant 0 : index
    %c0_4 = arith.constant 0 : index
    %3 = vector.load %arg4[%c0_3, %c0_4] : memref<1x32xf32, #tpu.memory_space<vmem>>, vector<1x32xf32>
    %c0_5 = arith.constant 0 : index
    %c0_6 = arith.constant 0 : index
    %4 = vector.load %arg6[%c0_5, %c0_6] : memref<1x64xf32, #tpu.memory_space<vmem>>, vector<1x64xf32>
    %c0_7 = arith.constant 0 : index
    %c0_8 = arith.constant 0 : index
    %5 = vector.load %arg7[%c0_7, %c0_8] : memref<1x64xf32, #tpu.memory_space<vmem>>, vector<1x64xf32>
    %c0_9 = arith.constant 0 : index
    %c0_10 = arith.constant 0 : index
    %6 = vector.load %arg8[%c0_9, %c0_10] : memref<1x64xf32, #tpu.memory_space<vmem>>, vector<1x64xf32>
    %cst = arith.constant dense<0.000000e+00> : vector<16xf32>
    %7 = vector.multi_reduction <add>, %2, %cst [1] : vector<16x32xf32> to vector<16xf32>
    %8 = vector.shape_cast %7 : vector<16xf32> to vector<16x1xf32>
    %cst_11 = arith.constant 3.200000e+01 : f32
    %9 = vector.broadcast %cst_11 : f32 to vector<16x1xf32>
    %10 = arith.divf %8, %9 : vector<16x1xf32>
    %11 = arith.mulf %2, %2 : vector<16x32xf32>
    %cst_12 = arith.constant dense<0.000000e+00> : vector<16xf32>
    %12 = vector.multi_reduction <add>, %11, %cst_12 [1] : vector<16x32xf32> to vector<16xf32>
    %13 = vector.shape_cast %12 : vector<16xf32> to vector<16x1xf32>
    %cst_13 = arith.constant 3.200000e+01 : f32
    %14 = vector.broadcast %cst_13 : f32 to vector<16x1xf32>
    %15 = arith.divf %13, %14 : vector<16x1xf32>
    %16 = arith.mulf %10, %10 : vector<16x1xf32>
    %17 = arith.subf %15, %16 : vector<16x1xf32>
    %cst_14 = arith.constant 0.000000e+00 : f32
    %18 = vector.broadcast %cst_14 : f32 to vector<16x1xf32>
    %19 = arith.maximumf %17, %18 : vector<16x1xf32>
    %20 = vector.broadcast %10 : vector<16x1xf32> to vector<16x32xf32>
    %21 = arith.subf %2, %20 : vector<16x32xf32>
    %cst_15 = arith.constant 9.99999974E-6 : f32
    %22 = vector.broadcast %cst_15 : f32 to vector<16x1xf32>
    %23 = arith.addf %19, %22 : vector<16x1xf32>
    %24 = math.rsqrt %23 : vector<16x1xf32>
    %25 = vector.broadcast %24 : vector<16x1xf32> to vector<16x32xf32>
    %26 = arith.mulf %21, %25 : vector<16x32xf32>
    %27 = arith.truncf %26 : vector<16x32xf32> to vector<16x32xbf16>
    %c0_16 = arith.constant 0 : index
    %c0_17 = arith.constant 0 : index
    %28 = vector.load %arg3[%c0_16, %c0_17] : memref<32x32xbf16, #tpu.memory_space<vmem>>, vector<32x32xbf16>
    %cst_18 = arith.constant dense<0.000000e+00> : vector<16x32xf32>
    %29 = tpu.matmul %27, %28, %cst_18 {dimension_numbers = #tpu.dot_dimension_numbers<[1], [0], [0], [1], [0, 0, 1, 1], [], []>} : vector<16x32xbf16>, vector<32x32xbf16>, vector<16x32xf32> -> vector<16x32xf32>
    %30 = vector.broadcast %3 : vector<1x32xf32> to vector<16x32xf32>
    %31 = arith.addf %29, %30 : vector<16x32xf32>
    %cst_19 = arith.constant 5.000000e-01 : f32
    %32 = vector.broadcast %cst_19 : f32 to vector<16x32xf32>
    %33 = arith.mulf %32, %31 : vector<16x32xf32>
    %cst_20 = arith.constant 0.707106769 : f32
    %34 = vector.broadcast %cst_20 : f32 to vector<16x32xf32>
    %35 = arith.mulf %31, %34 : vector<16x32xf32>
    %36 = math.erf %35 : vector<16x32xf32>
    %cst_21 = arith.constant 1.000000e+00 : f32
    %37 = vector.broadcast %cst_21 : f32 to vector<16x32xf32>
    %38 = arith.addf %37, %36 : vector<16x32xf32>
    %39 = arith.mulf %33, %38 : vector<16x32xf32>
    %40 = arith.truncf %39 : vector<16x32xf32> to vector<16x32xbf16>
    %c0_22 = arith.constant 0 : index
    %c0_23 = arith.constant 0 : index
    %41 = vector.load %arg5[%c0_22, %c0_23] : memref<32x64xbf16, #tpu.memory_space<vmem>>, vector<32x64xbf16>
    %cst_24 = arith.constant dense<0.000000e+00> : vector<16x64xf32>
    %42 = tpu.matmul %40, %41, %cst_24 {dimension_numbers = #tpu.dot_dimension_numbers<[1], [0], [0], [1], [0, 0, 1, 1], [], []>} : vector<16x32xbf16>, vector<32x64xbf16>, vector<16x64xf32> -> vector<16x64xf32>
    %43 = vector.broadcast %4 : vector<1x64xf32> to vector<16x64xf32>
    %44 = arith.addf %42, %43 : vector<16x64xf32>
    %cst_25 = arith.constant dense<0.000000e+00> : vector<16xf32>
    %45 = vector.multi_reduction <add>, %44, %cst_25 [1] : vector<16x64xf32> to vector<16xf32>
    %46 = vector.shape_cast %45 : vector<16xf32> to vector<16x1xf32>
    %cst_26 = arith.constant 6.400000e+01 : f32
    %47 = vector.broadcast %cst_26 : f32 to vector<16x1xf32>
    %48 = arith.divf %46, %47 : vector<16x1xf32>
    %49 = arith.mulf %44, %44 : vector<16x64xf32>
    %cst_27 = arith.constant dense<0.000000e+00> : vector<16xf32>
    %50 = vector.multi_reduction <add>, %49, %cst_27 [1] : vector<16x64xf32> to vector<16xf32>
    %51 = vector.shape_cast %50 : vector<16xf32> to vector<16x1xf32>
    %cst_28 = arith.constant 6.400000e+01 : f32
    %52 = vector.broadcast %cst_28 : f32 to vector<16x1xf32>
    %53 = arith.divf %51, %52 : vector<16x1xf32>
    %54 = arith.mulf %48, %48 : vector<16x1xf32>
    %55 = arith.subf %53, %54 : vector<16x1xf32>
    %cst_29 = arith.constant 0.000000e+00 : f32
    %56 = vector.broadcast %cst_29 : f32 to vector<16x1xf32>
    %57 = arith.maximumf %55, %56 : vector<16x1xf32>
    %58 = vector.broadcast %48 : vector<16x1xf32> to vector<16x64xf32>
    %59 = arith.subf %44, %58 : vector<16x64xf32>
    %cst_30 = arith.constant 9.99999974E-6 : f32
    %60 = vector.broadcast %cst_30 : f32 to vector<16x1xf32>
    %61 = arith.addf %57, %60 : vector<16x1xf32>
    %62 = math.rsqrt %61 : vector<16x1xf32>
    %63 = vector.broadcast %62 : vector<16x1xf32> to vector<16x64xf32>
    %64 = arith.mulf %59, %63 : vector<16x64xf32>
    %65 = vector.broadcast %5 : vector<1x64xf32> to vector<16x64xf32>
    %66 = arith.mulf %64, %65 : vector<16x64xf32>
    %67 = vector.broadcast %6 : vector<1x64xf32> to vector<16x64xf32>
    %68 = arith.addf %66, %67 : vector<16x64xf32>
    %c0_31 = arith.constant 0 : index
    %c0_32 = arith.constant 0 : index
    %69 = vector.load %arg9[%c0_31, %c0_32] : memref<16x64xf32, #tpu.memory_space<vmem>>, vector<16x64xf32>
    tpu.vector_store %arg9[%c0_31, %c0_32], %68 {strides = array<i32>} : memref<16x64xf32, #tpu.memory_space<vmem>>, vector<16x64xf32>,
    return
  }
  func.func @transform_0(%arg0: i32) -> (i32, i32) {
    %c0_i32 = arith.constant 0 : i32
    %c0_i32_0 = arith.constant 0 : i32
    return %arg0, %c0_i32 : i32, i32
  }
  func.func @transform_1(%arg0: i32) -> (i32, i32) {
    %c1_i32 = arith.constant 1 : i32
    %c0_i32 = arith.constant 0 : i32
    %0 = arith.cmpi eq, %c1_i32, %c0_i32 : i32
    %c1_i32_0 = arith.constant 1 : i32
    %1 = arith.select %0, %c1_i32_0, %c1_i32 : i32
    %2 = arith.remsi %arg0, %1 : i32
    %c0_i32_1 = arith.constant 0 : i32
    %3 = arith.cmpi ne, %2, %c0_i32_1 : i32
    %c0_i32_2 = arith.constant 0 : i32
    %4 = arith.cmpi slt, %2, %c0_i32_2 : i32
    %c0_i32_3 = arith.constant 0 : i32
    %5 = arith.cmpi slt, %1, %c0_i32_3 : i32
    %6 = arith.xori %4, %5 : i1
    %7 = arith.andi %6, %3 : i1
    %8 = arith.addi %2, %1 : i32
    %9 = arith.select %7, %8, %2 : i32
    %c0_i32_4 = arith.constant 0 : i32
    %c0_i32_5 = arith.constant 0 : i32
    return %9, %c0_i32_4 : i32, i32
  }
  func.func @transform_2(%arg0: i32) -> (i32, i32) {
    %c0_i32 = arith.constant 0 : i32
    %c0_i32_0 = arith.constant 0 : i32
    %c0_i32_1 = arith.constant 0 : i32
    return %c0_i32, %c0_i32_0 : i32, i32
  }
  func.func @transform_3(%arg0: i32) -> (i32, i32) {
    %c0_i32 = arith.constant 0 : i32
    %c0_i32_0 = arith.constant 0 : i32
    %c0_i32_1 = arith.constant 0 : i32
    return %c0_i32, %c0_i32_0 : i32, i32
  }
  func.func @transform_4(%arg0: i32) -> (i32, i32) {
    %c0_i32 = arith.constant 0 : i32
    %c0_i32_0 = arith.constant 0 : i32
    %c0_i32_1 = arith.constant 0 : i32
    return %c0_i32, %c0_i32_0 : i32, i32
  }
  func.func @transform_5(%arg0: i32) -> (i32, i32) {
    %c0_i32 = arith.constant 0 : i32
    %c0_i32_0 = arith.constant 0 : i32
    %c0_i32_1 = arith.constant 0 : i32
    return %c0_i32, %c0_i32_0 : i32, i32
  }
  func.func @transform_6(%arg0: i32) -> (i32, i32) {
    %c0_i32 = arith.constant 0 : i32
    %c0_i32_0 = arith.constant 0 : i32
    %c0_i32_1 = arith.constant 0 : i32
    return %c0_i32, %c0_i32_0 : i32, i32
  }
  func.func @transform_7(%arg0: i32) -> (i32, i32) {
    %c0_i32 = arith.constant 0 : i32
    %c0_i32_0 = arith.constant 0 : i32
    %c0_i32_1 = arith.constant 0 : i32
    return %c0_i32, %c0_i32_0 : i32, i32
  }
  func.func @transform_8(%arg0: i32) -> (i32, i32) {
    %c0_i32 = arith.constant 0 : i32
    %c0_i32_0 = arith.constant 0 : i32
    return %arg0, %c0_i32 : i32, i32
  }
}

module attributes {stable_mosaic.version = 11 : i64} {
  func.func @_wan_kernel_pos(%arg0: i32, %arg1: memref<16x32xf32, #tpu.memory_space<vmem>>, %arg2: memref<16x32xf32, #tpu.memory_space<vmem>>, %arg3: memref<32x32xbf16, #tpu.memory_space<vmem>>, %arg4: memref<1x32xf32, #tpu.memory_space<vmem>>, %arg5: memref<32x64xbf16, #tpu.memory_space<vmem>>, %arg6: memref<1x64xf32, #tpu.memory_space<vmem>>, %arg7: memref<1x64xf32, #tpu.memory_space<vmem>>, %arg8: memref<1x64xf32, #tpu.memory_space<vmem>>, %arg9: memref<16x64xf32, #tpu.memory_space<vmem>>) attributes {dimension_semantics = [#tpu.dimension_semantics<parallel>], iteration_bounds = array<i64: 1>, scalar_prefetch = 0 : i64, scratch_operands = 0 : i64, tpu.core_type = #tpu.core_type<tc>, window_params = [{transform_indices = @transform_0, window_bounds = array<i64: 16, 32>}, {transform_indices = @transform_1, window_bounds = array<i64: 16, 32>}, {pipeline_mode = #tpu.pipeline_mode<synchronous>, transform_indices = @transform_2, window_bounds = array<i64: 32, 32>}, {pipeline_mode = #tpu.pipeline_mode<synchronous>, transform_indices = @transform_3, window_bounds = array<i64: 1, 32>}, {pipeline_mode = #tpu.pipeline_mode<synchronous>, transform_indices = @transform_4, window_bounds = array<i64: 32, 64>}, {pipeline_mode = #tpu.pipeline_mode<synchronous>, transform_indices = @transform_5, window_bounds = array<i64: 1, 64>}, {pipeline_mode = #tpu.pipeline_mode<synchronous>, transform_indices = @transform_6, window_bounds = array<i64: 1, 64>}, {pipeline_mode = #tpu.pipeline_mode<synchronous>, transform_indices = @transform_7, window_bounds = array<i64: 1, 64>}, {transform_indices = @transform_8, window_bounds = array<i64: 16, 64>}]} {
    %c0 = arith.constant 0 : index
    %c0_0 = arith.constant 0 : index
    %0 = vector.load %arg1[%c0, %c0_0] : memref<16x32xf32, #tpu.memory_space<vmem>>, vector<16x32xf32>
    %c0_1 = arith.constant 0 : index
    %c0_2 = arith.constant 0 : index
    %1 = vector.load %arg2[%c0_1, %c0_2] : memref<16x32xf32, #tpu.memory_space<vmem>>, vector<16x32xf32>
    %2 = arith.addf %0, %1 : vector<16x32xf32>
    %c0_3 = arith.constant 0 : index
    %c0_4 = arith.constant 0 : index
    %3 = vector.load %arg4[%c0_3, %c0_4] : memref<1x32xf32, #tpu.memory_space<vmem>>, vector<1x32xf32>
    %c0_5 = arith.constant 0 : index
    %c0_6 = arith.constant 0 : index
    %4 = vector.load %arg6[%c0_5, %c0_6] : memref<1x64xf32, #tpu.memory_space<vmem>>, vector<1x64xf32>
    %c0_7 = arith.constant 0 : index
    %c0_8 = arith.constant 0 : index
    %5 = vector.load %arg7[%c0_7, %c0_8] : memref<1x64xf32, #tpu.memory_space<vmem>>, vector<1x64xf32>
    %c0_9 = arith.constant 0 : index
    %c0_10 = arith.constant 0 : index
    %6 = vector.load %arg8[%c0_9, %c0_10] : memref<1x64xf32, #tpu.memory_space<vmem>>, vector<1x64xf32>
    %cst = arith.constant dense<0.000000e+00> : vector<16xf32>
    %7 = vector.multi_reduction <add>, %2, %cst [1] : vector<16x32xf32> to vector<16xf32>
    %8 = vector.shape_cast %7 : vector<16xf32> to vector<16x1xf32>
    %cst_11 = arith.constant 3.200000e+01 : f32
    %9 = vector.broadcast %cst_11 : f32 to vector<16x1xf32>
    %10 = arith.divf %8, %9 : vector<16x1xf32>
    %11 = arith.mulf %2, %2 : vector<16x32xf32>
    %cst_12 = arith.constant dense<0.000000e+00> : vector<16xf32>
    %12 = vector.multi_reduction <add>, %11, %cst_12 [1] : vector<16x32xf32> to vector<16xf32>
    %13 = vector.shape_cast %12 : vector<16xf32> to vector<16x1xf32>
    %cst_13 = arith.constant 3.200000e+01 : f32
    %14 = vector.broadcast %cst_13 : f32 to vector<16x1xf32>
    %15 = arith.divf %13, %14 : vector<16x1xf32>
    %16 = arith.mulf %10, %10 : vector<16x1xf32>
    %17 = arith.subf %15, %16 : vector<16x1xf32>
    %cst_14 = arith.constant 0.000000e+00 : f32
    %18 = vector.broadcast %cst_14 : f32 to vector<16x1xf32>
    %19 = arith.maximumf %17, %18 : vector<16x1xf32>
    %20 = vector.broadcast %10 : vector<16x1xf32> to vector<16x32xf32>
    %21 = arith.subf %2, %20 : vector<16x32xf32>
    %cst_15 = arith.constant 9.99999974E-6 : f32
    %22 = vector.broadcast %cst_15 : f32 to vector<16x1xf32>
    %23 = arith.addf %19, %22 : vector<16x1xf32>
    %24 = math.rsqrt %23 : vector<16x1xf32>
    %25 = vector.broadcast %24 : vector<16x1xf32> to vector<16x32xf32>
    %26 = arith.mulf %21, %25 : vector<16x32xf32>
    %27 = arith.truncf %26 : vector<16x32xf32> to vector<16x32xbf16>
    %c0_16 = arith.constant 0 : index
    %c0_17 = arith.constant 0 : index
    %28 = vector.load %arg3[%c0_16, %c0_17] : memref<32x32xbf16, #tpu.memory_space<vmem>>, vector<32x32xbf16>
    %cst_18 = arith.constant dense<0.000000e+00> : vector<16x32xf32>
    %29 = tpu.matmul %27, %28, %cst_18 {dimension_numbers = #tpu.dot_dimension_numbers<[1], [0], [0], [1], [0, 0, 1, 1], [], []>} : vector<16x32xbf16>, vector<32x32xbf16>, vector<16x32xf32> -> vector<16x32xf32>
    %30 = vector.broadcast %3 : vector<1x32xf32> to vector<16x32xf32>
    %31 = arith.addf %29, %30 : vector<16x32xf32>
    %cst_19 = arith.constant 5.000000e-01 : f32
    %32 = vector.broadcast %cst_19 : f32 to vector<16x32xf32>
    %33 = arith.mulf %32, %31 : vector<16x32xf32>
    %cst_20 = arith.constant 0.707106769 : f32
    %34 = vector.broadcast %cst_20 : f32 to vector<16x32xf32>
    %35 = arith.mulf %31, %34 : vector<16x32xf32>
    %36 = math.erf %35 : vector<16x32xf32>
    %cst_21 = arith.constant 1.000000e+00 : f32
    %37 = vector.broadcast %cst_21 : f32 to vector<16x32xf32>
    %38 = arith.addf %37, %36 : vector<16x32xf32>
    %39 = arith.mulf %33, %38 : vector<16x32xf32>
    %40 = arith.truncf %39 : vector<16x32xf32> to vector<16x32xbf16>
    %c0_22 = arith.constant 0 : index
    %c0_23 = arith.constant 0 : index
    %41 = vector.load %arg5[%c0_22, %c0_23] : memref<32x64xbf16, #tpu.memory_space<vmem>>, vector<32x64xbf16>
    %cst_24 = arith.constant dense<0.000000e+00> : vector<16x64xf32>
    %42 = tpu.matmul %40, %41, %cst_24 {dimension_numbers = #tpu.dot_dimension_numbers<[1], [0], [0], [1], [0, 0, 1, 1], [], []>} : vector<16x32xbf16>, vector<32x64xbf16>, vector<16x64xf32> -> vector<16x64xf32>
    %43 = vector.broadcast %4 : vector<1x64xf32> to vector<16x64xf32>
    %44 = arith.addf %42, %43 : vector<16x64xf32>
    %cst_25 = arith.constant dense<0.000000e+00> : vector<16xf32>
    %45 = vector.multi_reduction <add>, %44, %cst_25 [1] : vector<16x64xf32> to vector<16xf32>
    %46 = vector.shape_cast %45 : vector<16xf32> to vector<16x1xf32>
    %cst_26 = arith.constant 6.400000e+01 : f32
    %47 = vector.broadcast %cst_26 : f32 to vector<16x1xf32>
    %48 = arith.divf %46, %47 : vector<16x1xf32>
    %49 = arith.mulf %44, %44 : vector<16x64xf32>
    %cst_27 = arith.constant dense<0.000000e+00> : vector<16xf32>
    %50 = vector.multi_reduction <add>, %49, %cst_27 [1] : vector<16x64xf32> to vector<16xf32>
    %51 = vector.shape_cast %50 : vector<16xf32> to vector<16x1xf32>
    %cst_28 = arith.constant 6.400000e+01 : f32
    %52 = vector.broadcast %cst_28 : f32 to vector<16x1xf32>
    %53 = arith.divf %51, %52 : vector<16x1xf32>
    %54 = arith.mulf %48, %48 : vector<16x1xf32>
    %55 = arith.subf %53, %54 : vector<16x1xf32>
    %cst_29 = arith.constant 0.000000e+00 : f32
    %56 = vector.broadcast %cst_29 : f32 to vector<16x1xf32>
    %57 = arith.maximumf %55, %56 : vector<16x1xf32>
    %58 = vector.broadcast %48 : vector<16x1xf32> to vector<16x64xf32>
    %59 = arith.subf %44, %58 : vector<16x64xf32>
    %cst_30 = arith.constant 9.99999974E-6 : f32
    %60 = vector.broadcast %cst_30 : f32 to vector<16x1xf32>
    %61 = arith.addf %57, %60 : vector<16x1xf32>
    %62 = math.rsqrt %61 : vector<16x1xf32>
    %63 = vector.broadcast %62 : vector<16x1xf32> to vector<16x64xf32>
    %64 = arith.mulf %59, %63 : vector<16x64xf32>
    %65 = vector.broadcast %5 : vector<1x64xf32> to vector<16x64xf32>
    %66 = arith.mulf %64, %65 : vector<16x64xf32>
    %67 = vector.broadcast %6 : vector<1x64xf32> to vector<16x64xf32>
    %68 = arith.addf %66, %67 : vector<16x64xf32>
    %c0_31 = arith.constant 0 : index
    %c0_32 = arith.constant 0 : index
    %69 = vector.load %arg9[%c0_31, %c0_32] : memref<16x64xf32, #tpu.memory_space<vmem>>, vector<16x64xf32>
    tpu.vector_store %arg9[%c0_31, %c0_32], %68 {strides = array<i32>} : memref<16x64xf32, #tpu.memory_space<vmem>>, vector<16x64xf32>,
    return
  }
  func.func @transform_0(%arg0: i32) -> (i32, i32) {
    %c0_i32 = arith.constant 0 : i32
    %c0_i32_0 = arith.constant 0 : i32
    return %arg0, %c0_i32 : i32, i32
  }
  func.func @transform_1(%arg0: i32) -> (i32, i32) {
    %c1_i32 = arith.constant 1 : i32
    %c0_i32 = arith.constant 0 : i32
    %0 = arith.cmpi eq, %c1_i32, %c0_i32 : i32
    %c1_i32_0 = arith.constant 1 : i32
    %1 = arith.select %0, %c1_i32_0, %c1_i32 : i32
    %2 = arith.remsi %arg0, %1 : i32
    %c0_i32_1 = arith.constant 0 : i32
    %3 = arith.cmpi ne, %2, %c0_i32_1 : i32
    %c0_i32_2 = arith.constant 0 : i32
    %4 = arith.cmpi slt, %2, %c0_i32_2 : i32
    %c0_i32_3 = arith.constant 0 : i32
    %5 = arith.cmpi slt, %1, %c0_i32_3 : i32
    %6 = arith.xori %4, %5 : i1
    %7 = arith.andi %6, %3 : i1
    %8 = arith.addi %2, %1 : i32
    %9 = arith.select %7, %8, %2 : i32
    %c0_i32_4 = arith.constant 0 : i32
    %c0_i32_5 = arith.constant 0 : i32
    return %9, %c0_i32_4 : i32, i32
  }
  func.func @transform_2(%arg0: i32) -> (i32, i32) {
    %c0_i32 = arith.constant 0 : i32
    %c0_i32_0 = arith.constant 0 : i32
    %c0_i32_1 = arith.constant 0 : i32
    return %c0_i32, %c0_i32_0 : i32, i32
  }
  func.func @transform_3(%arg0: i32) -> (i32, i32) {
    %c0_i32 = arith.constant 0 : i32
    %c0_i32_0 = arith.constant 0 : i32
    %c0_i32_1 = arith.constant 0 : i32
    return %c0_i32, %c0_i32_0 : i32, i32
  }
  func.func @transform_4(%arg0: i32) -> (i32, i32) {
    %c0_i32 = arith.constant 0 : i32
    %c0_i32_0 = arith.constant 0 : i32
    %c0_i32_1 = arith.constant 0 : i32
    return %c0_i32, %c0_i32_0 : i32, i32
  }
  func.func @transform_5(%arg0: i32) -> (i32, i32) {
    %c0_i32 = arith.constant 0 : i32
    %c0_i32_0 = arith.constant 0 : i32
    %c0_i32_1 = arith.constant 0 : i32
    return %c0_i32, %c0_i32_0 : i32, i32
  }
  func.func @transform_6(%arg0: i32) -> (i32, i32) {
    %c0_i32 = arith.constant 0 : i32
    %c0_i32_0 = arith.constant 0 : i32
    %c0_i32_1 = arith.constant 0 : i32
    return %c0_i32, %c0_i32_0 : i32, i32
  }
  func.func @transform_7(%arg0: i32) -> (i32, i32) {
    %c0_i32 = arith.constant 0 : i32
    %c0_i32_0 = arith.constant 0 : i32
    %c0_i32_1 = arith.constant 0 : i32
    return %c0_i32, %c0_i32_0 : i32, i32
  }
  func.func @transform_8(%arg0: i32) -> (i32, i32) {
    %c0_i32 = arith.constant 0 : i32
    %c0_i32_0 = arith.constant 0 : i32
    return %arg0, %c0_i32 : i32, i32
  }
}

</mosaic_0001>

<llo_original>
// kernel: tpu_custom_call.1
$region0: #{tpu_custom_call.1}
  #allocation0 [shape = 'u32[]', space=smem, size = 0x4, offset = 0x4, fixed_abs, tag = 'smem constant byte address 0x4 - core index']
  #allocation1 [shape = 'u32[144,128]{1,0:T(1,128)}', space=vmem, size = 0x12000, scoped, tag = 'internal scratch']
  %s0 = inlined_call_operand.hbm [shape: f32[16,32], index: 0, kind: input, shape index: {}]
  %s1 = inlined_call_operand.hbm [shape: f32[16,32], index: 1, kind: input, shape index: {}]
  %s2 = inlined_call_operand.hbm [shape: bf16[32,32], index: 2, kind: input, shape index: {}]
  %s3 = inlined_call_operand.vmem [shape: f32[1,32], index: 3, kind: input, shape index: {}]
  %s4 = inlined_call_operand.hbm [shape: bf16[32,64], index: 4, kind: input, shape index: {}]
  %s5 = inlined_call_operand.vmem [shape: f32[1,64], index: 5, kind: input, shape index: {}]
  %s6 = inlined_call_operand.vmem [shape: f32[1,64], index: 6, kind: input, shape index: {}]
  %s7 = inlined_call_operand.vmem [shape: f32[1,64], index: 7, kind: input, shape index: {}]
  %s8 = inlined_call_operand.hbm [shape: f32[16,64], index: 8, kind: output, shape index: {}]
  %s9 = sld [smem:[#allocation0]]
  $region58: #{tpu_custom_call.1} parent=0
    _
  %s11 = ssub.s32 1, %s9
  %s12 = scalar_select 0, %s11, %s9
  $region1: #{tpu_custom_call.1} parent=0
    #allocation2 [shape = 'u8[8192]{0}', space=vmem, size = 0x2000, scoped, tag = 'input window, operand 0, single buffered']
    #allocation3 [shape = 's32[1]{0}', space=sflag, size = 0x4, scoped, tag = 'scoped memory for tpu_custom_call.1']
    #allocation4 [shape = 's32[1]{0}', space=sflag, size = 0x4, scoped, tag = 'scoped memory for tpu_custom_call.1']
    #allocation5 [shape = 'u8[8192]{0}', space=vmem, size = 0x2000, scoped, tag = 'input window, operand 1, single buffered']
    #allocation6 [shape = 's32[1]{0}', space=sflag, size = 0x4, scoped, tag = 'scoped memory for tpu_custom_call.1']
    #allocation7 [shape = 'u8[8192]{0}', space=vmem, size = 0x2000, scoped, tag = 'input window, operand 2, single buffered']
    #allocation8 [shape = 'u8[8192]{0}', space=vmem, size = 0x2000, scoped, tag = 'input window, operand 4, single buffered']
    #allocation9 [shape = 's32[1]{0}', space=sflag, size = 0x4, scoped, tag = 'scoped memory for tpu_custom_call.1']
    #allocation10 [shape = 'u8[8192]{0}', space=vmem, size = 0x2000, scoped, tag = 'output window, operand 0, single buffered']
    %13 = vsyncpa [#allocation3], 0
    %14 = vsyncpa [#allocation6], 0
    %15 = vsyncpa [#allocation9], 0
    %16 = vsyncpa [#allocation4], 0
    // Predicated region
    $region2: #{tpu_custom_call.1} parent=1 // pred_check
      _
    $region3: #{tpu_custom_call.1} parent=1 // pred_check_branch
      %18 = sbr.rel (0) target = $region5
    $region4: #{tpu_custom_call.1} parent=1 // pred_region
      %s20 = ssub.s32 256, 256
      %21 = vsyncadd [#allocation3], %s20
      %s22 = sshll.u32 [#allocation2], 4
      %s23 = int_to_ptr.vmem [resolvable:$true] %s22
      %28 = dma.hbm_to_vmem [thread:$0]  %s0, 256, %s23, [#allocation3], 128, 128, 8
    $region5: #{tpu_custom_call.1} parent=1 // pred_fallthru
      _
    // Predicated region
    $region6: #{tpu_custom_call.1} parent=1 // pred_check
      _
    $region7: #{tpu_custom_call.1} parent=1 // pred_check_branch
      %30 = sbr.rel (0) target = $region9
    $region8: #{tpu_custom_call.1} parent=1 // pred_region
      %s32 = ssub.s32 256, 256
      %33 = vsyncadd [#allocation6], %s32
      %s34 = sshll.u32 [#allocation5], 4
      %s35 = int_to_ptr.vmem [resolvable:$true] %s34
      %40 = dma.hbm_to_vmem [thread:$0]  %s1, 256, %s35, [#allocation6], 128, 128, 8
    $region9: #{tpu_custom_call.1} parent=1 // pred_fallthru
      _
    // Predicated region
    $region10: #{tpu_custom_call.1} parent=1 // pred_check
      _
    $region11: #{tpu_custom_call.1} parent=1 // pred_check_branch
      %42 = sbr.rel (0) target = $region13
    $region12: #{tpu_custom_call.1} parent=1 // pred_region
      %s44 = ssub.s32 256, 256
      %45 = vsyncadd [#allocation6], %s44
      %s46 = sshll.u32 [#allocation7], 4
      %s47 = int_to_ptr.vmem [resolvable:$true] %s46
      %52 = dma.hbm_to_vmem [thread:$0]  %s2, 256, %s47, [#allocation6], 64, 64, 4
    $region13: #{tpu_custom_call.1} parent=1 // pred_fallthru
      _
    // Predicated region
    $region14: #{tpu_custom_call.1} parent=1 // pred_check
      _
    $region15: #{tpu_custom_call.1} parent=1 // pred_check_branch
      %54 = sbr.rel (0) target = $region17
    $region16: #{tpu_custom_call.1} parent=1 // pred_region
      _
    $region17: #{tpu_custom_call.1} parent=1 // pred_fallthru
      _
    // Predicated region
    $region18: #{tpu_custom_call.1} parent=1 // pred_check
      _
    $region19: #{tpu_custom_call.1} parent=1 // pred_check_branch
      %56 = sbr.rel (0) target = $region21
    $region20: #{tpu_custom_call.1} parent=1 // pred_region
      %s58 = ssub.s32 256, 256
      %59 = vsyncadd [#allocation9], %s58
      %s60 = sshll.u32 [#allocation8], 4
      %s61 = int_to_ptr.vmem [resolvable:$true] %s60
      %66 = dma.hbm_to_vmem [thread:$0]  %s4, 256, %s61, [#allocation9], 64, 64, 4
    $region21: #{tpu_custom_call.1} parent=1 // pred_fallthru
      _
    // Predicated region
    $region22: #{tpu_custom_call.1} parent=1 // pred_check
      _
    $region23: #{tpu_custom_call.1} parent=1 // pred_check_branch
      %68 = sbr.rel (0) target = $region25
    $region24: #{tpu_custom_call.1} parent=1 // pred_region
      _
    $region25: #{tpu_custom_call.1} parent=1 // pred_fallthru
      _
    // Predicated region
    $region26: #{tpu_custom_call.1} parent=1 // pred_check
      _
    $region27: #{tpu_custom_call.1} parent=1 // pred_check_branch
      %70 = sbr.rel (0) target = $region29
    $region28: #{tpu_custom_call.1} parent=1 // pred_region
      _
    $region29: #{tpu_custom_call.1} parent=1 // pred_fallthru
      _
    // Predicated region
    $region30: #{tpu_custom_call.1} parent=1 // pred_check
      _
    $region31: #{tpu_custom_call.1} parent=1 // pred_check_branch
      %72 = sbr.rel (0) target = $region33
    $region32: #{tpu_custom_call.1} parent=1 // pred_region
      _
    $region33: #{tpu_custom_call.1} parent=1 // pred_fallthru
      _
    // Predicated region
    $region34: #{tpu_custom_call.1} parent=1 // pred_check
      _
    $region35: #{tpu_custom_call.1} parent=1 // pred_check_branch
      %74 = sbr.rel (0) target = $region37
    $region36: #{tpu_custom_call.1} parent=1 // pred_region
      %75 = dma.done [#allocation3], 256
    $region37: #{tpu_custom_call.1} parent=1 // pred_fallthru
      _
    // Predicated region
    $region38: #{tpu_custom_call.1} parent=1 // pred_check
      _
    $region39: #{tpu_custom_call.1} parent=1 // pred_check_branch
      %77 = sbr.rel (0) target = $region41
    $region40: #{tpu_custom_call.1} parent=1 // pred_region
      %78 = dma.done [#allocation6], 256
    $region41: #{tpu_custom_call.1} parent=1 // pred_fallthru
      _
    // Predicated region
    $region42: #{tpu_custom_call.1} parent=1 // pred_check
      _
    $region43: #{tpu_custom_call.1} parent=1 // pred_check_branch
      %80 = sbr.rel (0) target = $region45
    $region44: #{tpu_custom_call.1} parent=1 // pred_region
      %81 = dma.done [#allocation6], 256
    $region45: #{tpu_custom_call.1} parent=1 // pred_fallthru
      _
    // Predicated region
    $region46: #{tpu_custom_call.1} parent=1 // pred_check
      _
    $region47: #{tpu_custom_call.1} parent=1 // pred_check_branch
      %83 = sbr.rel (0) target = $region49
    $region48: #{tpu_custom_call.1} parent=1 // pred_region
      %84 = dma.done [#allocation9], 256
    $region49: #{tpu_custom_call.1} parent=1 // pred_fallthru
      _
    %v86 = vld [vmem:[#allocation2] sm:$0xff]
    %v87 = vld [vmem:[#allocation2 + $0x8] sm:$0xff]
    %v88 = vld [vmem:[#allocation5] sm:$0xff]
    %v89 = vld [vmem:[#allocation5 + $0x8] sm:$0xff]
    %v90 = vadd.f32 %v86, %v88
    %v91 = vadd.f32 %v87, %v89
    %v92 = vld [vmem:[%s3] sm:$0x1]
    %v93 = vld [vmem:[%s5] sm:$0x1]
    %v94 = vld [vmem:[%s6] sm:$0x1]
    %v95 = vld [vmem:[%s7] sm:$0x1]
    %vm96 = vcmask 261120
    %v97 = vsel %vm96, %v90, 0.0
    %98 = vadd.xlane.f32.xlu0 %v97
    %v99 = vpop.xlane.xlu0 %98
    %v100 = vsel %vm96, %v91, 0.0
    %101 = vadd.xlane.f32.xlu0 %v100
    %v102 = vpop.xlane.xlu0 %101
    %v103 = vrcp.pop 32.0
    %v104 = vmul.f32 %v99, %v103
    %v105 = vmul.f32 %v102, %v103
    %v106 = vmul.f32 %v90, %v90
    %v107 = vmul.f32 %v91, %v91
    %v108 = vsel %vm96, %v106, 0.0
    %109 = vadd.xlane.f32.xlu0 %v108
    %v110 = vpop.xlane.xlu0 %109
    %v111 = vsel %vm96, %v107, 0.0
    %112 = vadd.xlane.f32.xlu0 %v111
    %v113 = vpop.xlane.xlu0 %112
    %v114 = vmul.f32 %v110, %v103
    %v115 = vmul.f32 %v113, %v103
    %v116 = vmul.f32 %v104, %v104
    %v117 = vmul.f32 %v105, %v105
    %v118 = vsub.f32 %v114, %v116
    %v119 = vsub.f32 %v115, %v117
    %v120 = vmax.f32 %v118, 0.0
    %v121 = vmax.f32 %v119, 0.0
    %v122 = vsub.f32 %v90, %v104
    %v123 = vsub.f32 %v91, %v105
    %v124 = vadd.f32 %v120, 1e-05
    %v125 = vadd.f32 %v121, 1e-05
    %v126 = vrsqrt.pop %v124
    %v127 = vrsqrt.pop %v125
    %v128 = vmul.f32 %v122, %v126
    %v129 = vmul.f32 %v123, %v127
    %v130 = vpack.c.bf16 %v129, %v128
    %v131 = vld [vmem:[#allocation7] sm:$0xf]
    %v132 = vld [vmem:[#allocation7 + $0x4] sm:$0xf]
    %v133 = vld [vmem:[#allocation7 + $0x8] sm:$0xf]
    %v134 = vld [vmem:[#allocation7 + $0xc] sm:$0xf]
    %v136 = vlaneseq
    %v137 = vshrl.u32 %v136, 7
    %v138 = vsub.s32 0, %v137
    %v139 = vrot.slane %v92, %v138
    %v145 = vunpack.c.l.b16 %v131
    %v146 = vunpack.c.l.b16 %v132
    %v147 = vunpack.c.l.b16 %v133
    %v148 = vunpack.c.l.b16 %v134
    %v149 = vpack.c.b16 %v146, %v145
    %v150 = vpack.c.b16 %v148, %v147
    %v154 = vsel %vm96, %v130, 0
    %156 = vmatprep.subr.bf16.mxu0 0
    %157 = vmatpush1.bf16.msra.mxu0 0
    %158 = vmatprep.subr.bf16.mxu0 0
    %159 = vmatpush1.bf16.msra.mxu0 0
    %160 = vmatprep.subr.bf16.mxu0 0
    %161 = vmatpush1.bf16.msra.mxu0 0
    %162 = vmatprep.subr.bf16.mxu0 0
    %163 = vmatpush1.bf16.msra.mxu0 0
    %164 = vmatprep.subr.bf16.mxu0 0
    %165 = vmatpush1.bf16.msra.mxu0 0
    %166 = vmatprep.subr.bf16.mxu0 0
    %167 = vmatpush1.bf16.msra.mxu0 0
    %168 = vmatprep.subr.bf16.mxu0 0
    %169 = vmatpush1.bf16.msra.mxu0 %v150
    %170 = vmatprep.subr.bf16.mxu0 0
    %171 = vmatpush1.bf16.msra.mxu0 %v149
    %172 = vmatprep.subr.bf16.mxu0 0
    %173 = vmatpush2.bf16.msra.mxu0 0
    %174 = vmatprep.subr.bf16.mxu0 0
    %175 = vmatpush2.bf16.msra.mxu0 0
    %176 = vmatprep.subr.bf16.mxu0 0
    %177 = vmatpush2.bf16.msra.mxu0 0
    %178 = vmatprep.subr.bf16.mxu0 0
    %179 = vmatpush2.bf16.msra.mxu0 0
    %180 = vmatprep.subr.bf16.mxu0 0
    %181 = vmatpush2.bf16.msra.mxu0 0
    %182 = vmatprep.subr.bf16.mxu0 0
    %183 = vmatpush2.bf16.msra.mxu0 0
    %184 = vmatprep.subr.bf16.mxu0 0
    %185 = vmatpush2.bf16.msra.mxu0 0
    %186 = vmatprep.subr.bf16.mxu0 0
    %187 = vmatpush2.bf16.msra.mxu0 0
    %188 = vmatprep.mubr.bf16.mxu0 0
    %189 = vmatmul.mubr.bf16.gmra.mxu0 %v154
    %v190 = vpop.f32.mrf.mxu0
    %v191 = vadd.f32 %v139, %v190
    %v192 = vpop.f32.mrf.mxu0
    %v193 = vpop.f32.mrf.mxu0
    %v194 = vadd.f32 %v139, %v193
    %v195 = vpop.f32.mrf.mxu0
    %196 = vdwg.mxu0
    %v197 = vmul.f32 %v191, 0.5
    %v198 = vmul.f32 %v194, 0.5
    %v199 = vmul.f32 %v191, 0.70710677
    %v200 = vmul.f32 %v194, 0.70710677
    %v201 = verf.f32.pop %v199
    %v202 = verf.f32.pop %v200
    %v203 = vadd.f32 %v201, 1.0
    %v204 = vadd.f32 %v202, 1.0
    %v205 = vmul.f32 %v197, %v203
    %v206 = vmul.f32 %v198, %v204
    %v207 = vpack.c.bf16 %v206, %v205
    %v208 = vld [vmem:[#allocation8] sm:$0xf]
    %v209 = vld [vmem:[#allocation8 + $0x4] sm:$0xf]
    %v210 = vld [vmem:[#allocation8 + $0x8] sm:$0xf]
    %v211 = vld [vmem:[#allocation8 + $0xc] sm:$0xf]
    %v213 = vlaneseq
    %v214 = vshrl.u32 %v213, 7
    %v215 = vsub.s32 0, %v214
    %v216 = vrot.slane %v93, %v215
    %v222 = vunpack.c.l.b16 %v208
    %v223 = vunpack.c.l.b16 %v209
    %v224 = vunpack.c.l.b16 %v210
    %v225 = vunpack.c.l.b16 %v211
    %v226 = vpack.c.b16 %v223, %v222
    %v227 = vpack.c.b16 %v225, %v224
    %v231 = vsel %vm96, %v207, 0
    %233 = vmatprep.subr.bf16.mxu0 0
    %234 = vmatpush1.bf16.msra.mxu0 0
    %235 = vmatprep.subr.bf16.mxu0 0
    %236 = vmatpush1.bf16.msra.mxu0 0
    %237 = vmatprep.subr.bf16.mxu0 0
    %238 = vmatpush1.bf16.msra.mxu0 0
    %239 = vmatprep.subr.bf16.mxu0 0
    %240 = vmatpush1.bf16.msra.mxu0 0
    %241 = vmatprep.subr.bf16.mxu0 0
    %242 = vmatpush1.bf16.msra.mxu0 0
    %243 = vmatprep.subr.bf16.mxu0 0
    %244 = vmatpush1.bf16.msra.mxu0 0
    %245 = vmatprep.subr.bf16.mxu0 0
    %246 = vmatpush1.bf16.msra.mxu0 %v227
    %247 = vmatprep.subr.bf16.mxu0 0
    %248 = vmatpush1.bf16.msra.mxu0 %v226
    %249 = vmatprep.subr.bf16.mxu0 0
    %250 = vmatpush2.bf16.msra.mxu0 0
    %251 = vmatprep.subr.bf16.mxu0 0
    %252 = vmatpush2.bf16.msra.mxu0 0
    %253 = vmatprep.subr.bf16.mxu0 0
    %254 = vmatpush2.bf16.msra.mxu0 0
    %255 = vmatprep.subr.bf16.mxu0 0
    %256 = vmatpush2.bf16.msra.mxu0 0
    %257 = vmatprep.subr.bf16.mxu0 0
    %258 = vmatpush2.bf16.msra.mxu0 0
    %259 = vmatprep.subr.bf16.mxu0 0
    %260 = vmatpush2.bf16.msra.mxu0 0
    %261 = vmatprep.subr.bf16.mxu0 0
    %262 = vmatpush2.bf16.msra.mxu0 0
    %263 = vmatprep.subr.bf16.mxu0 0
    %264 = vmatpush2.bf16.msra.mxu0 0
    %265 = vmatprep.mubr.bf16.mxu0 0
    %266 = vmatmul.mubr.bf16.gmra.mxu0 %v231
    %v267 = vpop.f32.mrf.mxu0
    %v268 = vadd.f32 %v216, %v267
    %v269 = vpop.f32.mrf.mxu0
    %v270 = vpop.f32.mrf.mxu0
    %v271 = vadd.f32 %v216, %v270
    %v272 = vpop.f32.mrf.mxu0
    %273 = vdwg.mxu0
    %vm274 = vcmask 523264
    %v275 = vsel %vm274, %v268, 0.0
    %276 = vadd.xlane.f32.xlu0 %v275
    %v277 = vpop.xlane.xlu0 %276
    %v278 = vsel %vm274, %v271, 0.0
    %279 = vadd.xlane.f32.xlu0 %v278
    %v280 = vpop.xlane.xlu0 %279
    %v281 = vrcp.pop 64.0
    %v282 = vmul.f32 %v277, %v281
    %v283 = vmul.f32 %v280, %v281
    %v284 = vmul.f32 %v268, %v268
    %v285 = vmul.f32 %v271, %v271
    %v286 = vsel %vm274, %v284, 0.0
    %287 = vadd.xlane.f32.xlu0 %v286
    %v288 = vpop.xlane.xlu0 %287
    %v289 = vsel %vm274, %v285, 0.0
    %290 = vadd.xlane.f32.xlu0 %v289
    %v291 = vpop.xlane.xlu0 %290
    %v292 = vmul.f32 %v288, %v281
    %v293 = vmul.f32 %v291, %v281
    %v294 = vmul.f32 %v282, %v282
    %v295 = vmul.f32 %v283, %v283
    %v296 = vsub.f32 %v292, %v294
    %v297 = vsub.f32 %v293, %v295
    %v298 = vmax.f32 %v296, 0.0
    %v299 = vmax.f32 %v297, 0.0
    %v300 = vsub.f32 %v268, %v282
    %v301 = vsub.f32 %v271, %v283
    %v302 = vadd.f32 %v298, 1e-05
    %v303 = vadd.f32 %v299, 1e-05
    %v304 = vrsqrt.pop %v302
    %v305 = vrsqrt.pop %v303
    %v306 = vmul.f32 %v300, %v304
    %v307 = vmul.f32 %v301, %v305
    %v309 = vlaneseq
    %v310 = vshrl.u32 %v309, 7
    %v311 = vsub.s32 0, %v310
    %v312 = vrot.slane %v94, %v311
    %v314 = vmul.f32 %v306, %v312
    %v315 = vmul.f32 %v307, %v312
    %v317 = vlaneseq
    %v318 = vshrl.u32 %v317, 7
    %v319 = vsub.s32 0, %v318
    %v320 = vrot.slane %v95, %v319
    %v322 = vadd.f32 %v314, %v320
    %v323 = vadd.f32 %v315, %v320
    %324 = vst.msk [vmem:[#allocation10] sm:$0xff] %vm274, %v322
    %325 = vst.msk [vmem:[#allocation10 + $0x8] sm:$0xff] %vm274, %v323
    // Predicated region
    $region50: #{tpu_custom_call.1} parent=1 // pred_check
      _
    $region51: #{tpu_custom_call.1} parent=1 // pred_check_branch
      %327 = sbr.rel (0) target = $region53
    $region52: #{tpu_custom_call.1} parent=1 // pred_region
      %s329 = ssub.s32 256, 256
      %330 = vsyncadd [#allocation4], %s329
      %s331 = sshll.u32 [#allocation10], 4
      %s332 = int_to_ptr.vmem [resolvable:$true] %s331
      %337 = dma.vmem_to_hbm [thread:$0]  %s332, 256, %s8, [#allocation4], 128, 128, 8
    $region53: #{tpu_custom_call.1} parent=1 // pred_fallthru
      _
    // Predicated region
    $region54: #{tpu_custom_call.1} parent=1 // pred_check
      _
    $region55: #{tpu_custom_call.1} parent=1 // pred_check_branch
      %339 = sbr.rel (0) target = $region57
    $region56: #{tpu_custom_call.1} parent=1 // pred_region
      %340 = dma.done [#allocation4], 256
    $region57: #{tpu_custom_call.1} parent=1 // pred_fallthru
      _
    %341 = vsyncpa [#allocation3], 1
    %342 = vsyncpa [#allocation6], 1
    %343 = vsyncpa [#allocation9], 1
    %344 = vsyncpa [#allocation4], 1

// kernel: tpu_custom_call.1
$region0: #{tpu_custom_call.1}
  #allocation0 [shape = 'u32[]', space=smem, size = 0x4, offset = 0x4, fixed_abs, tag = 'smem constant byte address 0x4 - core index']
  #allocation1 [shape = 'u32[144,128]{1,0:T(1,128)}', space=vmem, size = 0x12000, scoped, tag = 'internal scratch']
  %s0 = inlined_call_operand.hbm [shape: f32[16,32], index: 0, kind: input, shape index: {}]
  %s1 = inlined_call_operand.hbm [shape: f32[16,32], index: 1, kind: input, shape index: {}]
  %s2 = inlined_call_operand.hbm [shape: bf16[32,32], index: 2, kind: input, shape index: {}]
  %s3 = inlined_call_operand.vmem [shape: f32[1,32], index: 3, kind: input, shape index: {}]
  %s4 = inlined_call_operand.hbm [shape: bf16[32,64], index: 4, kind: input, shape index: {}]
  %s5 = inlined_call_operand.vmem [shape: f32[1,64], index: 5, kind: input, shape index: {}]
  %s6 = inlined_call_operand.vmem [shape: f32[1,64], index: 6, kind: input, shape index: {}]
  %s7 = inlined_call_operand.vmem [shape: f32[1,64], index: 7, kind: input, shape index: {}]
  %s8 = inlined_call_operand.hbm [shape: f32[16,64], index: 8, kind: output, shape index: {}]
  %s9 = sld [smem:[#allocation0]]
  $region58: #{tpu_custom_call.1} parent=0
    _
  %s11 = ssub.s32 1, %s9
  %s12 = scalar_select 0, %s11, %s9
  $region1: #{tpu_custom_call.1} parent=0
    #allocation2 [shape = 'u8[8192]{0}', space=vmem, size = 0x2000, scoped, tag = 'input window, operand 0, single buffered']
    #allocation3 [shape = 's32[1]{0}', space=sflag, size = 0x4, scoped, tag = 'scoped memory for tpu_custom_call.1']
    #allocation4 [shape = 's32[1]{0}', space=sflag, size = 0x4, scoped, tag = 'scoped memory for tpu_custom_call.1']
    #allocation5 [shape = 'u8[8192]{0}', space=vmem, size = 0x2000, scoped, tag = 'input window, operand 1, single buffered']
    #allocation6 [shape = 's32[1]{0}', space=sflag, size = 0x4, scoped, tag = 'scoped memory for tpu_custom_call.1']
    #allocation7 [shape = 'u8[8192]{0}', space=vmem, size = 0x2000, scoped, tag = 'input window, operand 2, single buffered']
    #allocation8 [shape = 'u8[8192]{0}', space=vmem, size = 0x2000, scoped, tag = 'input window, operand 4, single buffered']
    #allocation9 [shape = 's32[1]{0}', space=sflag, size = 0x4, scoped, tag = 'scoped memory for tpu_custom_call.1']
    #allocation10 [shape = 'u8[8192]{0}', space=vmem, size = 0x2000, scoped, tag = 'output window, operand 0, single buffered']
    %13 = vsyncpa [#allocation3], 0
    %14 = vsyncpa [#allocation6], 0
    %15 = vsyncpa [#allocation9], 0
    %16 = vsyncpa [#allocation4], 0
    // Predicated region
    $region2: #{tpu_custom_call.1} parent=1 // pred_check
      _
    $region3: #{tpu_custom_call.1} parent=1 // pred_check_branch
      %18 = sbr.rel (0) target = $region5
    $region4: #{tpu_custom_call.1} parent=1 // pred_region
      %s20 = ssub.s32 256, 256
      %21 = vsyncadd [#allocation3], %s20
      %s22 = sshll.u32 [#allocation2], 4
      %s23 = int_to_ptr.vmem [resolvable:$true] %s22
      %28 = dma.hbm_to_vmem [thread:$0]  %s0, 256, %s23, [#allocation3], 128, 128, 8
    $region5: #{tpu_custom_call.1} parent=1 // pred_fallthru
      _
    // Predicated region
    $region6: #{tpu_custom_call.1} parent=1 // pred_check
      _
    $region7: #{tpu_custom_call.1} parent=1 // pred_check_branch
      %30 = sbr.rel (0) target = $region9
    $region8: #{tpu_custom_call.1} parent=1 // pred_region
      %s32 = ssub.s32 256, 256
      %33 = vsyncadd [#allocation6], %s32
      %s34 = sshll.u32 [#allocation5], 4
      %s35 = int_to_ptr.vmem [resolvable:$true] %s34
      %40 = dma.hbm_to_vmem [thread:$0]  %s1, 256, %s35, [#allocation6], 128, 128, 8
    $region9: #{tpu_custom_call.1} parent=1 // pred_fallthru
      _
    // Predicated region
    $region10: #{tpu_custom_call.1} parent=1 // pred_check
      _
    $region11: #{tpu_custom_call.1} parent=1 // pred_check_branch
      %42 = sbr.rel (0) target = $region13
    $region12: #{tpu_custom_call.1} parent=1 // pred_region
      %s44 = ssub.s32 256, 256
      %45 = vsyncadd [#allocation6], %s44
      %s46 = sshll.u32 [#allocation7], 4
      %s47 = int_to_ptr.vmem [resolvable:$true] %s46
      %52 = dma.hbm_to_vmem [thread:$0]  %s2, 256, %s47, [#allocation6], 64, 64, 4
    $region13: #{tpu_custom_call.1} parent=1 // pred_fallthru
      _
    // Predicated region
    $region14: #{tpu_custom_call.1} parent=1 // pred_check
      _
    $region15: #{tpu_custom_call.1} parent=1 // pred_check_branch
      %54 = sbr.rel (0) target = $region17
    $region16: #{tpu_custom_call.1} parent=1 // pred_region
      _
    $region17: #{tpu_custom_call.1} parent=1 // pred_fallthru
      _
    // Predicated region
    $region18: #{tpu_custom_call.1} parent=1 // pred_check
      _
    $region19: #{tpu_custom_call.1} parent=1 // pred_check_branch
      %56 = sbr.rel (0) target = $region21
    $region20: #{tpu_custom_call.1} parent=1 // pred_region
      %s58 = ssub.s32 256, 256
      %59 = vsyncadd [#allocation9], %s58
      %s60 = sshll.u32 [#allocation8], 4
      %s61 = int_to_ptr.vmem [resolvable:$true] %s60
      %66 = dma.hbm_to_vmem [thread:$0]  %s4, 256, %s61, [#allocation9], 64, 64, 4
    $region21: #{tpu_custom_call.1} parent=1 // pred_fallthru
      _
    // Predicated region
    $region22: #{tpu_custom_call.1} parent=1 // pred_check
      _
    $region23: #{tpu_custom_call.1} parent=1 // pred_check_branch
      %68 = sbr.rel (0) target = $region25
    $region24: #{tpu_custom_call.1} parent=1 // pred_region
      _
    $region25: #{tpu_custom_call.1} parent=1 // pred_fallthru
      _
    // Predicated region
    $region26: #{tpu_custom_call.1} parent=1 // pred_check
      _
    $region27: #{tpu_custom_call.1} parent=1 // pred_check_branch
      %70 = sbr.rel (0) target = $region29
    $region28: #{tpu_custom_call.1} parent=1 // pred_region
      _
    $region29: #{tpu_custom_call.1} parent=1 // pred_fallthru
      _
    // Predicated region
    $region30: #{tpu_custom_call.1} parent=1 // pred_check
      _
    $region31: #{tpu_custom_call.1} parent=1 // pred_check_branch
      %72 = sbr.rel (0) target = $region33
    $region32: #{tpu_custom_call.1} parent=1 // pred_region
      _
    $region33: #{tpu_custom_call.1} parent=1 // pred_fallthru
      _
    // Predicated region
    $region34: #{tpu_custom_call.1} parent=1 // pred_check
      _
    $region35: #{tpu_custom_call.1} parent=1 // pred_check_branch
      %74 = sbr.rel (0) target = $region37
    $region36: #{tpu_custom_call.1} parent=1 // pred_region
      %75 = dma.done [#allocation3], 256
    $region37: #{tpu_custom_call.1} parent=1 // pred_fallthru
      _
    // Predicated region
    $region38: #{tpu_custom_call.1} parent=1 // pred_check
      _
    $region39: #{tpu_custom_call.1} parent=1 // pred_check_branch
      %77 = sbr.rel (0) target = $region41
    $region40: #{tpu_custom_call.1} parent=1 // pred_region
      %78 = dma.done [#allocation6], 256
    $region41: #{tpu_custom_call.1} parent=1 // pred_fallthru
      _
    // Predicated region
    $region42: #{tpu_custom_call.1} parent=1 // pred_check
      _
    $region43: #{tpu_custom_call.1} parent=1 // pred_check_branch
      %80 = sbr.rel (0) target = $region45
    $region44: #{tpu_custom_call.1} parent=1 // pred_region
      %81 = dma.done [#allocation6], 256
    $region45: #{tpu_custom_call.1} parent=1 // pred_fallthru
      _
    // Predicated region
    $region46: #{tpu_custom_call.1} parent=1 // pred_check
      _
    $region47: #{tpu_custom_call.1} parent=1 // pred_check_branch
      %83 = sbr.rel (0) target = $region49
    $region48: #{tpu_custom_call.1} parent=1 // pred_region
      %84 = dma.done [#allocation9], 256
    $region49: #{tpu_custom_call.1} parent=1 // pred_fallthru
      _
    %v86 = vld [vmem:[#allocation2] sm:$0xff]
    %v87 = vld [vmem:[#allocation2 + $0x8] sm:$0xff]
    %v88 = vld [vmem:[#allocation5] sm:$0xff]
    %v89 = vld [vmem:[#allocation5 + $0x8] sm:$0xff]
    %v90 = vadd.f32 %v86, %v88
    %v91 = vadd.f32 %v87, %v89
    %v92 = vld [vmem:[%s3] sm:$0x1]
    %v93 = vld [vmem:[%s5] sm:$0x1]
    %v94 = vld [vmem:[%s6] sm:$0x1]
    %v95 = vld [vmem:[%s7] sm:$0x1]
    %vm96 = vcmask 261120
    %v97 = vsel %vm96, %v90, 0.0
    %98 = vadd.xlane.f32.xlu0 %v97
    %v99 = vpop.xlane.xlu0 %98
    %v100 = vsel %vm96, %v91, 0.0
    %101 = vadd.xlane.f32.xlu0 %v100
    %v102 = vpop.xlane.xlu0 %101
    %v103 = vrcp.pop 32.0
    %v104 = vmul.f32 %v99, %v103
    %v105 = vmul.f32 %v102, %v103
    %v106 = vmul.f32 %v90, %v90
    %v107 = vmul.f32 %v91, %v91
    %v108 = vsel %vm96, %v106, 0.0
    %109 = vadd.xlane.f32.xlu0 %v108
    %v110 = vpop.xlane.xlu0 %109
    %v111 = vsel %vm96, %v107, 0.0
    %112 = vadd.xlane.f32.xlu0 %v111
    %v113 = vpop.xlane.xlu0 %112
    %v114 = vmul.f32 %v110, %v103
    %v115 = vmul.f32 %v113, %v103
    %v116 = vmul.f32 %v104, %v104
    %v117 = vmul.f32 %v105, %v105
    %v118 = vsub.f32 %v114, %v116
    %v119 = vsub.f32 %v115, %v117
    %v120 = vmax.f32 %v118, 0.0
    %v121 = vmax.f32 %v119, 0.0
    %v122 = vsub.f32 %v90, %v104
    %v123 = vsub.f32 %v91, %v105
    %v124 = vadd.f32 %v120, 1e-05
    %v125 = vadd.f32 %v121, 1e-05
    %v126 = vrsqrt.pop %v124
    %v127 = vrsqrt.pop %v125
    %v128 = vmul.f32 %v122, %v126
    %v129 = vmul.f32 %v123, %v127
    %v130 = vpack.c.bf16 %v129, %v128
    %v131 = vld [vmem:[#allocation7] sm:$0xf]
    %v132 = vld [vmem:[#allocation7 + $0x4] sm:$0xf]
    %v133 = vld [vmem:[#allocation7 + $0x8] sm:$0xf]
    %v134 = vld [vmem:[#allocation7 + $0xc] sm:$0xf]
    %v136 = vlaneseq
    %v137 = vshrl.u32 %v136, 7
    %v138 = vsub.s32 0, %v137
    %v139 = vrot.slane %v92, %v138
    %v145 = vunpack.c.l.b16 %v131
    %v146 = vunpack.c.l.b16 %v132
    %v147 = vunpack.c.l.b16 %v133
    %v148 = vunpack.c.l.b16 %v134
    %v149 = vpack.c.b16 %v146, %v145
    %v150 = vpack.c.b16 %v148, %v147
    %v154 = vsel %vm96, %v130, 0
    %156 = vmatprep.subr.bf16.mxu0 0
    %157 = vmatpush1.bf16.msra.mxu0 0
    %158 = vmatprep.subr.bf16.mxu0 0
    %159 = vmatpush1.bf16.msra.mxu0 0
    %160 = vmatprep.subr.bf16.mxu0 0
    %161 = vmatpush1.bf16.msra.mxu0 0
    %162 = vmatprep.subr.bf16.mxu0 0
    %163 = vmatpush1.bf16.msra.mxu0 0
    %164 = vmatprep.subr.bf16.mxu0 0
    %165 = vmatpush1.bf16.msra.mxu0 0
    %166 = vmatprep.subr.bf16.mxu0 0
    %167 = vmatpush1.bf16.msra.mxu0 0
    %168 = vmatprep.subr.bf16.mxu0 0
    %169 = vmatpush1.bf16.msra.mxu0 %v150
    %170 = vmatprep.subr.bf16.mxu0 0
    %171 = vmatpush1.bf16.msra.mxu0 %v149
    %172 = vmatprep.subr.bf16.mxu0 0
    %173 = vmatpush2.bf16.msra.mxu0 0
    %174 = vmatprep.subr.bf16.mxu0 0
    %175 = vmatpush2.bf16.msra.mxu0 0
    %176 = vmatprep.subr.bf16.mxu0 0
    %177 = vmatpush2.bf16.msra.mxu0 0
    %178 = vmatprep.subr.bf16.mxu0 0
    %179 = vmatpush2.bf16.msra.mxu0 0
    %180 = vmatprep.subr.bf16.mxu0 0
    %181 = vmatpush2.bf16.msra.mxu0 0
    %182 = vmatprep.subr.bf16.mxu0 0
    %183 = vmatpush2.bf16.msra.mxu0 0
    %184 = vmatprep.subr.bf16.mxu0 0
    %185 = vmatpush2.bf16.msra.mxu0 0
    %186 = vmatprep.subr.bf16.mxu0 0
    %187 = vmatpush2.bf16.msra.mxu0 0
    %188 = vmatprep.mubr.bf16.mxu0 0
    %189 = vmatmul.mubr.bf16.gmra.mxu0 %v154
    %v190 = vpop.f32.mrf.mxu0
    %v191 = vadd.f32 %v139, %v190
    %v192 = vpop.f32.mrf.mxu0
    %v193 = vpop.f32.mrf.mxu0
    %v194 = vadd.f32 %v139, %v193
    %v195 = vpop.f32.mrf.mxu0
    %196 = vdwg.mxu0
    %v197 = vmul.f32 %v191, 0.5
    %v198 = vmul.f32 %v194, 0.5
    %v199 = vmul.f32 %v191, 0.70710677
    %v200 = vmul.f32 %v194, 0.70710677
    %v201 = verf.f32.pop %v199
    %v202 = verf.f32.pop %v200
    %v203 = vadd.f32 %v201, 1.0
    %v204 = vadd.f32 %v202, 1.0
    %v205 = vmul.f32 %v197, %v203
    %v206 = vmul.f32 %v198, %v204
    %v207 = vpack.c.bf16 %v206, %v205
    %v208 = vld [vmem:[#allocation8] sm:$0xf]
    %v209 = vld [vmem:[#allocation8 + $0x4] sm:$0xf]
    %v210 = vld [vmem:[#allocation8 + $0x8] sm:$0xf]
    %v211 = vld [vmem:[#allocation8 + $0xc] sm:$0xf]
    %v213 = vlaneseq
    %v214 = vshrl.u32 %v213, 7
    %v215 = vsub.s32 0, %v214
    %v216 = vrot.slane %v93, %v215
    %v222 = vunpack.c.l.b16 %v208
    %v223 = vunpack.c.l.b16 %v209
    %v224 = vunpack.c.l.b16 %v210
    %v225 = vunpack.c.l.b16 %v211
    %v226 = vpack.c.b16 %v223, %v222
    %v227 = vpack.c.b16 %v225, %v224
    %v231 = vsel %vm96, %v207, 0
    %233 = vmatprep.subr.bf16.mxu0 0
    %234 = vmatpush1.bf16.msra.mxu0 0
    %235 = vmatprep.subr.bf16.mxu0 0
    %236 = vmatpush1.bf16.msra.mxu0 0
    %237 = vmatprep.subr.bf16.mxu0 0
    %238 = vmatpush1.bf16.msra.mxu0 0
    %239 = vmatprep.subr.bf16.mxu0 0
    %240 = vmatpush1.bf16.msra.mxu0 0
    %241 = vmatprep.subr.bf16.mxu0 0
    %242 = vmatpush1.bf16.msra.mxu0 0
    %243 = vmatprep.subr.bf16.mxu0 0
    %244 = vmatpush1.bf16.msra.mxu0 0
    %245 = vmatprep.subr.bf16.mxu0 0
    %246 = vmatpush1.bf16.msra.mxu0 %v227
    %247 = vmatprep.subr.bf16.mxu0 0
    %248 = vmatpush1.bf16.msra.mxu0 %v226
    %249 = vmatprep.subr.bf16.mxu0 0
    %250 = vmatpush2.bf16.msra.mxu0 0
    %251 = vmatprep.subr.bf16.mxu0 0
    %252 = vmatpush2.bf16.msra.mxu0 0
    %253 = vmatprep.subr.bf16.mxu0 0
    %254 = vmatpush2.bf16.msra.mxu0 0
    %255 = vmatprep.subr.bf16.mxu0 0
    %256 = vmatpush2.bf16.msra.mxu0 0
    %257 = vmatprep.subr.bf16.mxu0 0
    %258 = vmatpush2.bf16.msra.mxu0 0
    %259 = vmatprep.subr.bf16.mxu0 0
    %260 = vmatpush2.bf16.msra.mxu0 0
    %261 = vmatprep.subr.bf16.mxu0 0
    %262 = vmatpush2.bf16.msra.mxu0 0
    %263 = vmatprep.subr.bf16.mxu0 0
    %264 = vmatpush2.bf16.msra.mxu0 0
    %265 = vmatprep.mubr.bf16.mxu0 0
    %266 = vmatmul.mubr.bf16.gmra.mxu0 %v231
    %v267 = vpop.f32.mrf.mxu0
    %v268 = vadd.f32 %v216, %v267
    %v269 = vpop.f32.mrf.mxu0
    %v270 = vpop.f32.mrf.mxu0
    %v271 = vadd.f32 %v216, %v270
    %v272 = vpop.f32.mrf.mxu0
    %273 = vdwg.mxu0
    %vm274 = vcmask 523264
    %v275 = vsel %vm274, %v268, 0.0
    %276 = vadd.xlane.f32.xlu0 %v275
    %v277 = vpop.xlane.xlu0 %276
    %v278 = vsel %vm274, %v271, 0.0
    %279 = vadd.xlane.f32.xlu0 %v278
    %v280 = vpop.xlane.xlu0 %279
    %v281 = vrcp.pop 64.0
    %v282 = vmul.f32 %v277, %v281
    %v283 = vmul.f32 %v280, %v281
    %v284 = vmul.f32 %v268, %v268
    %v285 = vmul.f32 %v271, %v271
    %v286 = vsel %vm274, %v284, 0.0
    %287 = vadd.xlane.f32.xlu0 %v286
    %v288 = vpop.xlane.xlu0 %287
    %v289 = vsel %vm274, %v285, 0.0
    %290 = vadd.xlane.f32.xlu0 %v289
    %v291 = vpop.xlane.xlu0 %290
    %v292 = vmul.f32 %v288, %v281
    %v293 = vmul.f32 %v291, %v281
    %v294 = vmul.f32 %v282, %v282
    %v295 = vmul.f32 %v283, %v283
    %v296 = vsub.f32 %v292, %v294
    %v297 = vsub.f32 %v293, %v295
    %v298 = vmax.f32 %v296, 0.0
    %v299 = vmax.f32 %v297, 0.0
    %v300 = vsub.f32 %v268, %v282
    %v301 = vsub.f32 %v271, %v283
    %v302 = vadd.f32 %v298, 1e-05
    %v303 = vadd.f32 %v299, 1e-05
    %v304 = vrsqrt.pop %v302
    %v305 = vrsqrt.pop %v303
    %v306 = vmul.f32 %v300, %v304
    %v307 = vmul.f32 %v301, %v305
    %v309 = vlaneseq
    %v310 = vshrl.u32 %v309, 7
    %v311 = vsub.s32 0, %v310
    %v312 = vrot.slane %v94, %v311
    %v314 = vmul.f32 %v306, %v312
    %v315 = vmul.f32 %v307, %v312
    %v317 = vlaneseq
    %v318 = vshrl.u32 %v317, 7
    %v319 = vsub.s32 0, %v318
    %v320 = vrot.slane %v95, %v319
    %v322 = vadd.f32 %v314, %v320
    %v323 = vadd.f32 %v315, %v320
    %324 = vst.msk [vmem:[#allocation10] sm:$0xff] %vm274, %v322
    %325 = vst.msk [vmem:[#allocation10 + $0x8] sm:$0xff] %vm274, %v323
    // Predicated region
    $region50: #{tpu_custom_call.1} parent=1 // pred_check
      _
    $region51: #{tpu_custom_call.1} parent=1 // pred_check_branch
      %327 = sbr.rel (0) target = $region53
    $region52: #{tpu_custom_call.1} parent=1 // pred_region
      %s329 = ssub.s32 256, 256
      %330 = vsyncadd [#allocation4], %s329
      %s331 = sshll.u32 [#allocation10], 4
      %s332 = int_to_ptr.vmem [resolvable:$true] %s331
      %337 = dma.vmem_to_hbm [thread:$0]  %s332, 256, %s8, [#allocation4], 128, 128, 8
    $region53: #{tpu_custom_call.1} parent=1 // pred_fallthru
      _
    // Predicated region
    $region54: #{tpu_custom_call.1} parent=1 // pred_check
      _
    $region55: #{tpu_custom_call.1} parent=1 // pred_check_branch
      %339 = sbr.rel (0) target = $region57
    $region56: #{tpu_custom_call.1} parent=1 // pred_region
      %340 = dma.done [#allocation4], 256
    $region57: #{tpu_custom_call.1} parent=1 // pred_fallthru
      _
    %341 = vsyncpa [#allocation3], 1
    %342 = vsyncpa [#allocation6], 1
    %343 = vsyncpa [#allocation9], 1
    %344 = vsyncpa [#allocation4], 1

</llo_original>
